<compile_context>
chip_gen: v7x
topology: tpu7x:2x2x1
jax: 0.10.0
libtpu: 0.0.40
codegen_flags: <defaults>
</compile_context>

<pallas_src>
import math

import jax
import jax.numpy as jnp
from jax.experimental import pallas as pl
from jax.experimental.pallas import tpu as pltpu

_SQRT_2_OVER_PI = math.sqrt(2.0 / math.pi)

_MIN_SPLIT_BYTES = 1 << 20           # above ~1 MiB, force >=2 grid blocks (v7x megacore)
_FALLBACK_VMEM_BYTES = 64 << 20      # smallest per-TC VMEM across v5e/v6e/v7x


def _vmem_budget():
    """Return (vmem_limit_bytes, target_block_bytes) derived from the chip's VMEM."""
    try:
        cap = int(pltpu.get_tpu_info().vmem_capacity_bytes)
    except Exception:
        cap = _FALLBACK_VMEM_BYTES
    cap = max(cap, 16 << 20)
    vmem_limit = (cap * 3) // 4                   # ~48 MiB on v7x, ~96 MiB on v5e/v6e
    block_bytes = max(vmem_limit // 8, 1 << 20)   # in+out, double-buffered ≈ 4x block
    return vmem_limit, block_bytes


def _gelu_kernel(x_ref, o_ref):
    x = x_ref[...].astype(jnp.float32)
    inner = jnp.float32(_SQRT_2_OVER_PI) * (x + jnp.float32(0.044715) * (x * x * x))
    y = jnp.float32(0.5) * x * (jnp.float32(1.0) + jnp.tanh(inner))
    o_ref[...] = y.astype(o_ref.dtype)


def _pick_lane_width(n_elems):
    """Largest multiple-of-128 width that divides the flat element count exactly."""
    for w in (4096, 2048, 1024, 512, 256, 128):
        if n_elems % w == 0:
            return w
    return None


def _pick_row_tile(rows, width, dtype_bytes, block_bytes):
    """Row tile ~block_bytes per block, rounded to the dtype's sublane pack,
    and capped so tensors >~1 MiB always get >=2 grid blocks (v7x 2-TC sharding)."""
    pack = {4: 8, 2: 16, 1: 32}.get(dtype_bytes, 8)
    row_bytes = max(width * dtype_bytes, 1)
    total_bytes = rows * row_bytes
    tm = max(block_bytes // row_bytes, pack)
    if tm >= rows:
        if total_bytes <= _MIN_SPLIT_BYTES or rows < 2 * pack:
            return rows                       # single full-extent block (exempt from 8-rule)
        tm = rows
    if total_bytes > _MIN_SPLIT_BYTES:
        tm = min(tm, pl.cdiv(rows, 2))        # guarantee >= 2 blocks
    return max((tm // pack) * pack, pack)


def _run_2d(x2d, tm, vmem_limit):
    rows, width = x2d.shape
    n = rows * width
    dtype_bytes = jnp.dtype(x2d.dtype).itemsize
    cost = pl.CostEstimate(
        flops=9 * n,                          # ~8 VALU ops + mul per element
        transcendentals=n,                    # one tanh per element (EUP)
        bytes_accessed=2 * n * dtype_bytes,
    )
    return pl.pallas_call(
        _gelu_kernel,
        out_shape=jax.ShapeDtypeStruct((rows, width), x2d.dtype),
        grid_spec=pltpu.PrefetchScalarGridSpec(
            num_scalar_prefetch=0,
            grid=(pl.cdiv(rows, tm),),
            in_specs=[pl.BlockSpec((tm, width), lambda i: (i, 0))],
            out_specs=pl.BlockSpec((tm, width), lambda i: (i, 0)),
        ),
        compiler_params=pltpu.CompilerParams(
            dimension_semantics=("parallel",),
            vmem_limit_bytes=vmem_limit,
        ),
        cost_estimate=cost,
    )(x2d)


def gelu_pallas(x):
    """tanh-approx GELU matching the PyTorch reference forward exactly."""
    orig_shape = x.shape
    n = x.size
    if n == 0:
        return x
    dtype_bytes = jnp.dtype(x.dtype).itemsize
    vmem_limit, block_bytes = _vmem_budget()

    width = _pick_lane_width(n)
    if width is not None:
        # Lane-dense re-slab: last dim a large multiple of 128 -> unmasked vst.
        x2d = x.reshape(n // width, width)
        tm = _pick_row_tile(x2d.shape[0], width, dtype_bytes, block_bytes)
        out = _run_2d(x2d, tm, vmem_limit)
        return out.reshape(orig_shape)

    # Fallback: flat-pad the 1-D view to the next lane-dense multiple so every
    # store is a full-lane vst (not per-row masked vst.msk), then slice pad off.
    width = 512 if n >= 4096 else 128
    n_pad = ((n + width - 1) // width) * width
    xf = jnp.pad(x.reshape(-1), (0, n_pad - n))
    x2d = xf.reshape(n_pad // width, width)
    tm = _pick_row_tile(x2d.shape[0], width, dtype_bytes, block_bytes)
    out = _run_2d(x2d, tm, vmem_limit)
    return out.reshape(-1)[:n].reshape(orig_shape)


def gelu_ref(x):
    xf = x.astype(jnp.float32)
    c = jnp.float32(_SQRT_2_OVER_PI)
    return (0.5 * xf * (1.0 + jnp.tanh(c * (xf + 0.044715 * xf ** 3)))).astype(x.dtype)


if __name__ == "__main__":
    key = jax.random.PRNGKey(0)

    # GPT-style activation tensor: (batch=2, seq=8, hidden=32) -> lane-dense re-slab path.
    x = jax.random.normal(key, (2, 8, 32), dtype=jnp.float32)
    y = gelu_pallas(x)
    jax.block_until_ready(y)
    assert y.shape == x.shape and y.dtype == x.dtype
    assert jnp.allclose(y, gelu_ref(x), atol=1e-5, rtol=1e-5)

    # Odd size -> exercises the flat-pad lane-dense fallback path.
    x2 = jax.random.normal(jax.random.PRNGKey(1), (3, 7, 5), dtype=jnp.float32)
    y2 = gelu_pallas(x2)
    jax.block_until_ready(y2)
    assert y2.shape == x2.shape and y2.dtype == x2.dtype
    assert jnp.allclose(y2, gelu_ref(x2), atol=1e-5, rtol=1e-5)

    print("KERNEL_OK")
</pallas_src>

<mosaic_0001>
module attributes {stable_mosaic.version = 11 : i64} {
  func.func @_gelu_kernel(%arg0: i32, %arg1: memref<1x512xf32, #tpu.memory_space<vmem>>, %arg2: memref<1x512xf32, #tpu.memory_space<vmem>>) attributes {dimension_semantics = [#tpu.dimension_semantics<parallel>], iteration_bounds = array<i64: 1>, scalar_prefetch = 0 : i64, scratch_operands = 0 : i64, tpu.core_type = #tpu.core_type<tc>, window_params = [{transform_indices = @transform_0, window_bounds = array<i64: 1, 512>}, {transform_indices = @transform_1, window_bounds = array<i64: 1, 512>}]} {
    %c0 = arith.constant 0 : index
    %c0_0 = arith.constant 0 : index
    %0 = vector.load %arg1[%c0, %c0_0] : memref<1x512xf32, #tpu.memory_space<vmem>>, vector<1x512xf32>
    %1 = arith.mulf %0, %0 : vector<1x512xf32>
    %2 = arith.mulf %1, %0 : vector<1x512xf32>
    %cst = arith.constant 4.471500e-02 : f32
    %3 = vector.broadcast %cst : f32 to vector<1x512xf32>
    %4 = arith.mulf %3, %2 : vector<1x512xf32>
    %5 = arith.addf %0, %4 : vector<1x512xf32>
    %cst_1 = arith.constant 0.797884583 : f32
    %6 = vector.broadcast %cst_1 : f32 to vector<1x512xf32>
    %7 = arith.mulf %6, %5 : vector<1x512xf32>
    %cst_2 = arith.constant 5.000000e-01 : f32
    %8 = vector.broadcast %cst_2 : f32 to vector<1x512xf32>
    %9 = arith.mulf %8, %0 : vector<1x512xf32>
    %10 = math.tanh %7 : vector<1x512xf32>
    %cst_3 = arith.constant 1.000000e+00 : f32
    %11 = vector.broadcast %cst_3 : f32 to vector<1x512xf32>
    %12 = arith.addf %11, %10 : vector<1x512xf32>
    %13 = arith.mulf %9, %12 : vector<1x512xf32>
    %c0_4 = arith.constant 0 : index
    %c0_5 = arith.constant 0 : index
    %14 = vector.load %arg2[%c0_4, %c0_5] : memref<1x512xf32, #tpu.memory_space<vmem>>, vector<1x512xf32>
    tpu.vector_store %arg2[%c0_4, %c0_5], %13 {strides = array<i32>} : memref<1x512xf32, #tpu.memory_space<vmem>>, vector<1x512xf32>,
    return
  }
  func.func @transform_0(%arg0: i32) -> (i32, i32) {
    %c0_i32 = arith.constant 0 : i32
    %c0_i32_0 = arith.constant 0 : i32
    return %arg0, %c0_i32 : i32, i32
  }
  func.func @transform_1(%arg0: i32) -> (i32, i32) {
    %c0_i32 = arith.constant 0 : i32
    %c0_i32_0 = arith.constant 0 : i32
    return %arg0, %c0_i32 : i32, i32
  }
}

</mosaic_0001>

<llo_original>
// kernel: tpu_custom_call.1
$region0: #{tpu_custom_call.1}
  #allocation0 [shape = 'u32[]', space=smem, size = 0x4, offset = 0x4, fixed_abs, tag = 'smem constant byte address 0x4 - core index']
  #allocation1 [shape = 'u32[144,128]{1,0:T(1,128)}', space=vmem, size = 0x12000, scoped, tag = 'internal scratch']
  %s0 = inlined_call_operand.hbm [shape: f32[1,512], index: 0, kind: input, shape index: {}]
  %s1 = inlined_call_operand.hbm [shape: f32[1,512], index: 1, kind: output, shape index: {}]
  %s2 = sld [smem:[#allocation0]]
  $region18: #{tpu_custom_call.1} parent=0
    _
  %s4 = ssub.s32 1, %s2
  %s5 = scalar_select 0, %s4, %s2
  $region1: #{tpu_custom_call.1} parent=0
    #allocation2 [shape = 'u8[2048]{0}', space=vmem, size = 0x800, scoped, tag = 'input window, operand 0, single buffered']
    #allocation3 [shape = 's32[1]{0}', space=sflag, size = 0x4, scoped, tag = 'scoped memory for tpu_custom_call.1']
    #allocation4 [shape = 's32[1]{0}', space=sflag, size = 0x4, scoped, tag = 'scoped memory for tpu_custom_call.1']
    #allocation5 [shape = 'u8[2048]{0}', space=vmem, size = 0x800, scoped, tag = 'output window, operand 0, single buffered']
    %6 = vsyncpa [#allocation3], 0
    %7 = vsyncpa [#allocation4], 0
    // Predicated region
    $region2: #{tpu_custom_call.1} parent=1 // pred_check
      _
    $region3: #{tpu_custom_call.1} parent=1 // pred_check_branch
      %9 = sbr.rel (0) target = $region5
    $region4: #{tpu_custom_call.1} parent=1 // pred_region
      %s11 = ssub.s32 64, 64
      %12 = vsyncadd [#allocation3], %s11
      %s14 = sshll.u32 [#allocation2], 4
      %s15 = int_to_ptr.vmem [resolvable:$true] %s14
      %17 = dma.hbm_to_vmem [thread:$0]  %s0, 64, %s15, [#allocation3]
    $region5: #{tpu_custom_call.1} parent=1 // pred_fallthru
      _
    // Predicated region
    $region6: #{tpu_custom_call.1} parent=1 // pred_check
      _
    $region7: #{tpu_custom_call.1} parent=1 // pred_check_branch
      %19 = sbr.rel (0) target = $region9
    $region8: #{tpu_custom_call.1} parent=1 // pred_region
      %20 = dma.done [#allocation3], 64
    $region9: #{tpu_custom_call.1} parent=1 // pred_fallthru
      _
    %v21 = vld [vmem:[#allocation2] sm:$0xf]
    %v22 = vmul.f32 %v21, %v21
    %v23 = vmul.f32 %v22, %v21
    %v24 = vmul.f32 %v23, 0.044715
    %v25 = vadd.f32 %v21, %v24
    %v26 = vmul.f32 %v25, 0.7978846
    %v27 = vmul.f32 %v21, 0.5
    %v28 = vtanh.pop %v26
    %v29 = vadd.f32 %v28, 1.0
    %v30 = vmul.f32 %v27, %v29
    %v31 = vlaneseq
    %vm32 = vcmp.ge.s32.totalorder %v31, 0
    %vm33 = vcmp.lt.s32.totalorder %v31, 512
    %vm34 = vmand %vm32, %vm33
    %35 = vst.msk [vmem:[#allocation5] sm:$0xf] %vm34, %v30
    // Predicated region
    $region10: #{tpu_custom_call.1} parent=1 // pred_check
      _
    $region11: #{tpu_custom_call.1} parent=1 // pred_check_branch
      %37 = sbr.rel (0) target = $region13
    $region12: #{tpu_custom_call.1} parent=1 // pred_region
      %s39 = ssub.s32 64, 64
      %40 = vsyncadd [#allocation4], %s39
      %s42 = sshll.u32 [#allocation5], 4
      %s43 = int_to_ptr.vmem [resolvable:$true] %s42
      %45 = dma.vmem_to_hbm [thread:$0]  %s43, 64, %s1, [#allocation4]
    $region13: #{tpu_custom_call.1} parent=1 // pred_fallthru
      _
    // Predicated region
    $region14: #{tpu_custom_call.1} parent=1 // pred_check
      _
    $region15: #{tpu_custom_call.1} parent=1 // pred_check_branch
      %47 = sbr.rel (0) target = $region17
    $region16: #{tpu_custom_call.1} parent=1 // pred_region
      %48 = dma.done [#allocation4], 64
    $region17: #{tpu_custom_call.1} parent=1 // pred_fallthru
      _
    %49 = vsyncpa [#allocation3], 1
    %50 = vsyncpa [#allocation4], 1

</llo_original>
